<compile_context>
chip_gen: v7x
topology: tpu7x:2x2x1
jax: 0.10.0
libtpu: 0.0.40
codegen_flags: <defaults>
</compile_context>

<pallas_src>
import jax
import jax.numpy as jnp
from jax import lax
from jax.experimental import pallas as pl
from jax.experimental.pallas import tpu as pltpu

LANES = 128


def _cdiv(a, b):
    return -(-a // b)


def _round_up(x, m):
    return _cdiv(x, m) * m


def _round_down(x, m):
    return (x // m) * m


def _device_tuning():
    """Per-generation knobs: per-input-buffer byte budget, and whether the chip
    has two TensorCores worth splitting the 'parallel' grid axis across."""
    kind = ""
    try:
        kind = jax.devices()[0].device_kind.lower()
    except Exception:
        pass
    if "v7" in kind:                    # v7x: 2 TCs, 64 MiB VMEM per TC
        return 4 << 20, True
    if "v6" in kind:                    # v6e: 1 TC, 128 MiB VMEM
        return 4 << 20, False
    if "v5p" in kind or "v4" in kind:   # megacore chips: 2 TCs, 128 MiB VMEM
        return 4 << 20, True
    if "v5" in kind:                    # v5e / v5 lite: 16 MiB default scoped VMEM
        return 2 << 20, False
    return 2 << 20, False               # unknown: conservative


def _make_kernel(rows, steps, tile_r, acc_rows, needs_mask, edge_from,
                 chunk_rows=2048):
    """sum((t - p)^2) folded onto a resident (acc_rows, 128) f32 accumulator block."""

    def kernel(preds_ref, target_ref, out_ref):
        s = pl.program_id(0)
        k = pl.program_id(1)

        @pl.when(k == 0)
        def _init():
            out_ref[...] = jnp.zeros_like(out_ref)

        def accum(mask_rows):
            # Walk the tile in <= chunk_rows row chunks (static Python loop, unrolled)
            # so f32 intermediates stay ~1 MiB regardless of the DMA tile size, and
            # each chunk folds onto acc_rows independent add chains (pure VPU work).
            r0 = 0
            while r0 < tile_r:
                rc = min(chunk_rows, tile_r - r0)          # static; multiple of acc_rows
                t = target_ref[pl.ds(r0, rc), :].astype(jnp.float32)
                p = preds_ref[pl.ds(r0, rc), :].astype(jnp.float32)
                d = t - p
                if mask_rows:
                    # Zero rows past the logical end of the slab (partial last block /
                    # phantom blocks). Safe even if the OOB VMEM contents are garbage.
                    base = (s * steps + k) * tile_r + r0
                    rid = lax.broadcasted_iota(jnp.int32, (rc, LANES), 0) + base
                    d = jnp.where(rid < rows, d, 0.0)
                sq = d * d
                out_ref[...] += sq.reshape(rc // acc_rows, acc_rows, LANES).sum(axis=0)
                r0 += rc

        if needs_mask:
            # Only blocks at/after `edge_from` can extend past the array; everything
            # before runs the mask-free path.
            is_edge = (s * steps + k) >= edge_from
            pl.when(is_edge)(lambda: accum(True))
            pl.when(jnp.logical_not(is_edge))(lambda: accum(False))
        else:
            accum(False)

    return kernel


def loot_loss_l2(preds, target, z_constraints_min, z_constraints_max):
    """Pallas implementation of LootLossL2.forward(preds, target) -> scalar f32."""
    assert preds.shape == target.shape
    n = preds.size
    scale = (float(z_constraints_max) - float(z_constraints_min)) * 0.5
    scale2 = scale * scale

    flat_p = preds.reshape(-1)
    flat_t = target.reshape(-1)

    rows = n // LANES            # full 128-lane rows
    main = rows * LANES
    tail = n - main              # < 128 leftover elements

    def _sq_sum(p, t):
        d = t.astype(jnp.float32) - p.astype(jnp.float32)
        return jnp.sum(d * d)

    # Tiny inputs: a kernel launch is not worth it (and keeps tiling assumptions simple).
    if rows < 8:
        return (_sq_sum(flat_p, flat_t) * scale2 / float(n)).astype(jnp.float32)

    itemsize = int(preds.dtype.itemsize)
    budget_bytes, two_cores = _device_tuning()

    # ---------------- tiling ----------------
    ROW_ALIGN = 32 if rows >= 64 else 8
    tile_cap = max(ROW_ALIGN, _round_down(budget_bytes // (LANES * itemsize), ROW_ALIGN))

    num_splits = 2 if (two_cores and rows >= 64) else 1
    rows_per_split = _cdiv(rows, num_splits)
    steps = _cdiv(rows_per_split, tile_cap)
    tile_r = _round_up(_cdiv(rows_per_split, steps), ROW_ALIGN)
    if tile_r > rows:
        # Only possible for num_splits == 1, steps == 1: never let the block be taller
        # than the array (keeps block_shape <= array shape).
        tile_r = rows if rows % 8 == 0 else _round_down(rows, 8)
        steps = _cdiv(rows, tile_r)

    total_blocks = _cdiv(rows, tile_r)                 # real (non-phantom) blocks
    needs_mask = (num_splits * steps * tile_r) != rows
    edge_from = rows // tile_r                         # first block needing the row mask
    acc_rows = 32 if tile_r % 32 == 0 else 8           # accumulator block height

    # Input slabs: pure (free) reshape when N % 128 == 0; prefix slice only for the
    # rare ragged case (the <128-element tail is summed below in plain jnp).
    if tail:
        p_main, t_main = flat_p[:main], flat_t[:main]
    else:
        p_main, t_main = flat_p, flat_t
    p2 = p_main.reshape(rows, LANES)
    t2 = t_main.reshape(rows, LANES)

    # Block index maps.  If the rectangular (num_splits, steps) grid has phantom
    # trailing blocks, clamp their index to the last real block (their contribution is
    # zeroed by the in-kernel mask, since the mask uses the *unclamped* row offset).
    if num_splits * steps == total_blocks:
        def in_map(s, k):
            return (s * steps + k, 0)
    else:
        last_block = total_blocks - 1

        def in_map(s, k):
            return (jnp.minimum(s * steps + k, last_block), 0)

    def out_map(s, k):
        return (s, 0)

    # VMEM: 2 inputs x 2 pipeline buffers x tile, plus chunked-compute intermediates
    # (a few MiB) and the tiny resident accumulators.
    tile_in_bytes = tile_r * LANES * itemsize
    vmem_limit = max(4 * tile_in_bytes + (8 << 20), 16 << 20)

    out_bytes = num_splits * acc_rows * LANES * 4
    cost = pl.CostEstimate(
        flops=3 * main,                                  # sub, square, accumulate
        transcendentals=0,
        bytes_accessed=2 * main * itemsize + out_bytes,
    )

    kernel = _make_kernel(rows, steps, tile_r, acc_rows, needs_mask, edge_from)

    partials = pl.pallas_call(
        kernel,
        out_shape=jax.ShapeDtypeStruct((num_splits * acc_rows, LANES), jnp.float32),
        grid_spec=pltpu.PrefetchScalarGridSpec(
            num_scalar_prefetch=0,
            grid=(num_splits, steps),
            in_specs=[
                pl.BlockSpec((tile_r, LANES), in_map),
                pl.BlockSpec((tile_r, LANES), in_map),
            ],
            out_specs=pl.BlockSpec((acc_rows, LANES), out_map),
        ),
        compiler_params=pltpu.CompilerParams(
            dimension_semantics=("parallel", "arbitrary"),
            vmem_limit_bytes=int(vmem_limit),
        ),
        cost_estimate=cost,
    )(p2, t2)

    total_sum = jnp.sum(partials)
    if tail:
        total_sum = total_sum + _sq_sum(flat_p[main:], flat_t[main:])
    return (total_sum * scale2 / float(n)).astype(jnp.float32)


# Pure-JAX reference (mirrors the PyTorch module exactly).
def _loot_loss_l2_ref(preds, target, z_min, z_max):
    def denorm(c):
        return (c + 1.0) * (z_max - z_min) / 2.0 + z_min
    return jnp.mean((denorm(target) - denorm(preds)) ** 2).astype(jnp.float32)


if __name__ == "__main__":
    Z_MIN = -150.0
    Z_MAX = 150.0

    key = jax.random.PRNGKey(0)
    k0, k1, k2, k3 = jax.random.split(key, 4)

    # 1) Small, 128-aligned NCHW-ish shape (exact-tile fast path).
    shape = (2, 4, 16, 16)
    preds = jax.random.uniform(k0, shape, dtype=jnp.float32, minval=-1.0, maxval=1.0)
    target = jax.random.uniform(k1, shape, dtype=jnp.float32, minval=-1.0, maxval=1.0)
    loss = jax.block_until_ready(loot_loss_l2(preds, target, Z_MIN, Z_MAX))
    ref = jax.block_until_ready(_loot_loss_l2_ref(preds, target, Z_MIN, Z_MAX))
    assert jnp.allclose(loss, ref, rtol=1e-4, atol=1e-3), (loss, ref)

    # 2) Ragged shape: exercises the in-kernel row mask (partial last tile) and the
    #    <128-element tail summed in the wrapper (replaces the old jnp.pad path).
    shape2 = (3, 5, 25, 27)  # 10125 elements = 79*128 + 13
    preds2 = jax.random.uniform(k2, shape2, dtype=jnp.float32, minval=-1.0, maxval=1.0)
    target2 = jax.random.uniform(k3, shape2, dtype=jnp.float32, minval=-1.0, maxval=1.0)
    loss2 = jax.block_until_ready(loot_loss_l2(preds2, target2, Z_MIN, Z_MAX))
    ref2 = jax.block_until_ready(_loot_loss_l2_ref(preds2, target2, Z_MIN, Z_MAX))
    assert jnp.allclose(loss2, ref2, rtol=1e-4, atol=1e-3), (loss2, ref2)

    print("KERNEL_OK")
</pallas_src>

<mosaic_0001>
module attributes {stable_mosaic.version = 11 : i64} {
  func.func @kernel(%arg0: i32, %arg1: i32, %arg2: memref<16x128xf32, #tpu.memory_space<vmem>>, %arg3: memref<16x128xf32, #tpu.memory_space<vmem>>, %arg4: memref<8x128xf32, #tpu.memory_space<vmem>>) attributes {dimension_semantics = [#tpu.dimension_semantics<parallel>, #tpu.dimension_semantics<arbitrary>], iteration_bounds = array<i64: 1, 1>, scalar_prefetch = 0 : i64, scratch_operands = 0 : i64, tpu.core_type = #tpu.core_type<tc>, window_params = [{transform_indices = @transform_0, window_bounds = array<i64: 16, 128>}, {transform_indices = @transform_1, window_bounds = array<i64: 16, 128>}, {transform_indices = @transform_2, window_bounds = array<i64: 8, 128>}]} {
    %c0_i32 = arith.constant 0 : i32
    %0 = arith.cmpi eq, %arg1, %c0_i32 : i32
    %1 = arith.extui %0 : i1 to i32
    %c0_i32_0 = arith.constant 0 : i32
    %2 = arith.cmpi ne, %1, %c0_i32_0 : i32
    scf.if %2 {
      %cst_8 = arith.constant 0.000000e+00 : f32
      %12 = vector.broadcast %cst_8 : f32 to vector<8x128xf32>
      %c0_9 = arith.constant 0 : index
      %c0_10 = arith.constant 0 : index
      %13 = vector.load %arg4[%c0_9, %c0_10] : memref<8x128xf32, #tpu.memory_space<vmem>>, vector<8x128xf32>
      tpu.vector_store %arg4[%c0_9, %c0_10], %12 {strides = array<i32>} : memref<8x128xf32, #tpu.memory_space<vmem>>, vector<8x128xf32>,
    } else {
    }
    %c0 = arith.constant 0 : index
    %c0_1 = arith.constant 0 : index
    %3 = vector.load %arg3[%c0, %c0_1] : memref<16x128xf32, #tpu.memory_space<vmem>>, vector<16x128xf32>
    %c0_2 = arith.constant 0 : index
    %c0_3 = arith.constant 0 : index
    %4 = vector.load %arg2[%c0_2, %c0_3] : memref<16x128xf32, #tpu.memory_space<vmem>>, vector<16x128xf32>
    %5 = arith.subf %3, %4 : vector<16x128xf32>
    %6 = arith.mulf %5, %5 : vector<16x128xf32>
    %c0_4 = arith.constant 0 : index
    %c0_5 = arith.constant 0 : index
    %7 = vector.load %arg4[%c0_4, %c0_5] : memref<8x128xf32, #tpu.memory_space<vmem>>, vector<8x128xf32>
    %8 = vector.shape_cast %6 : vector<16x128xf32> to vector<2x8x128xf32>
    %cst = arith.constant dense<0.000000e+00> : vector<8x128xf32>
    %9 = vector.multi_reduction <add>, %8, %cst [0] : vector<2x8x128xf32> to vector<8x128xf32>
    %10 = arith.addf %7, %9 : vector<8x128xf32>
    %c0_6 = arith.constant 0 : index
    %c0_7 = arith.constant 0 : index
    %11 = vector.load %arg4[%c0_6, %c0_7] : memref<8x128xf32, #tpu.memory_space<vmem>>, vector<8x128xf32>
    tpu.vector_store %arg4[%c0_6, %c0_7], %10 {strides = array<i32>} : memref<8x128xf32, #tpu.memory_space<vmem>>, vector<8x128xf32>,
    return
  }
  func.func @transform_0(%arg0: i32, %arg1: i32) -> (i32, i32) {
    %c1_i32 = arith.constant 1 : i32
    %0 = arith.muli %arg0, %c1_i32 : i32
    %1 = arith.addi %0, %arg1 : i32
    %c0_i32 = arith.constant 0 : i32
    %c0_i32_0 = arith.constant 0 : i32
    return %1, %c0_i32 : i32, i32
  }
  func.func @transform_1(%arg0: i32, %arg1: i32) -> (i32, i32) {
    %c1_i32 = arith.constant 1 : i32
    %0 = arith.muli %arg0, %c1_i32 : i32
    %1 = arith.addi %0, %arg1 : i32
    %c0_i32 = arith.constant 0 : i32
    %c0_i32_0 = arith.constant 0 : i32
    return %1, %c0_i32 : i32, i32
  }
  func.func @transform_2(%arg0: i32, %arg1: i32) -> (i32, i32) {
    %c0_i32 = arith.constant 0 : i32
    %c0_i32_0 = arith.constant 0 : i32
    return %arg0, %c0_i32 : i32, i32
  }
}

</mosaic_0001>

<llo_original>
// kernel: tpu_custom_call.1
$region0: #{tpu_custom_call.1}
  #allocation0 [shape = 'u32[]', space=smem, size = 0x4, offset = 0x4, fixed_abs, tag = 'smem constant byte address 0x4 - core index']
  #allocation1 [shape = 'u32[144,128]{1,0:T(1,128)}', space=vmem, size = 0x12000, scoped, tag = 'internal scratch']
  %s0 = inlined_call_operand.hbm [shape: f32[16,128], index: 0, kind: input, shape index: {}]
  %s1 = inlined_call_operand.hbm [shape: f32[16,128], index: 1, kind: input, shape index: {}]
  %s2 = inlined_call_operand.hbm [shape: f32[8,128], index: 2, kind: output, shape index: {}]
  %s3 = sld [smem:[#allocation0]]
  $region30: #{tpu_custom_call.1} parent=0
    _
  %s5 = ssub.s32 1, %s3
  %s6 = scalar_select 0, %s5, %s3
  $region1: #{tpu_custom_call.1} parent=0
    #allocation2 [shape = 'u8[8192]{0}', space=vmem, size = 0x2000, scoped, tag = 'input window, operand 0, single buffered']
    #allocation3 [shape = 's32[1]{0}', space=sflag, size = 0x4, scoped, tag = 'scoped memory for tpu_custom_call.1']
    #allocation4 [shape = 's32[1]{0}', space=sflag, size = 0x4, scoped, tag = 'scoped memory for tpu_custom_call.1']
    #allocation5 [shape = 'u8[8192]{0}', space=vmem, size = 0x2000, scoped, tag = 'input window, operand 1, single buffered']
    #allocation6 [shape = 's32[1]{0}', space=sflag, size = 0x4, scoped, tag = 'scoped memory for tpu_custom_call.1']
    #allocation7 [shape = 'u8[4096]{0}', space=vmem, size = 0x1000, scoped, tag = 'output window, operand 0, single buffered']
    %7 = vsyncpa [#allocation3], 0
    %8 = vsyncpa [#allocation6], 0
    %9 = vsyncpa [#allocation4], 0
    // Predicated region
    $region2: #{tpu_custom_call.1} parent=1 // pred_check
      _
    $region3: #{tpu_custom_call.1} parent=1 // pred_check_branch
      %11 = sbr.rel (0) target = $region5
    $region4: #{tpu_custom_call.1} parent=1 // pred_region
      %s12 = sadd.s32 0, 0
      %s13 = smul.u32 2, %s12
      %s15 = ssub.s32 256, 256
      %16 = vsyncadd [#allocation3], %s15
      %s17 = smul.addr %s13, 128
      %s18 = scalar_lea.hbm %s0, %s17
      %s19 = sshll.u32 [#allocation2], 4
      %s20 = int_to_ptr.vmem [resolvable:$true] %s19
      %25 = dma.hbm_to_vmem [thread:$0]  %s18, 256, %s20, [#allocation3], 128, 128, 8
    $region5: #{tpu_custom_call.1} parent=1 // pred_fallthru
      _
    // Predicated region
    $region6: #{tpu_custom_call.1} parent=1 // pred_check
      _
    $region7: #{tpu_custom_call.1} parent=1 // pred_check_branch
      %27 = sbr.rel (0) target = $region9
    $region8: #{tpu_custom_call.1} parent=1 // pred_region
      %s28 = sadd.s32 0, 0
      %s29 = smul.u32 2, %s28
      %s31 = ssub.s32 256, 256
      %32 = vsyncadd [#allocation6], %s31
      %s33 = smul.addr %s29, 128
      %s34 = scalar_lea.hbm %s1, %s33
      %s35 = sshll.u32 [#allocation5], 4
      %s36 = int_to_ptr.vmem [resolvable:$true] %s35
      %41 = dma.hbm_to_vmem [thread:$0]  %s34, 256, %s36, [#allocation6], 128, 128, 8
    $region9: #{tpu_custom_call.1} parent=1 // pred_fallthru
      _
    // Predicated region
    $region10: #{tpu_custom_call.1} parent=1 // pred_check
      _
    $region11: #{tpu_custom_call.1} parent=1 // pred_check_branch
      %43 = sbr.rel (0) target = $region13
    $region12: #{tpu_custom_call.1} parent=1 // pred_region
      %44 = dma.done [#allocation3], 256
    $region13: #{tpu_custom_call.1} parent=1 // pred_fallthru
      _
    // Predicated region
    $region14: #{tpu_custom_call.1} parent=1 // pred_check
      _
    $region15: #{tpu_custom_call.1} parent=1 // pred_check_branch
      %46 = sbr.rel (0) target = $region17
    $region16: #{tpu_custom_call.1} parent=1 // pred_region
      %47 = dma.done [#allocation6], 256
    $region17: #{tpu_custom_call.1} parent=1 // pred_fallthru
      _
    %s48 = sadd.s32 0, 0
    %s49 = smul.u32 2, %s48
    %s50 = sadd.s32 0, 0
    %s51 = smul.u32 2, %s50
    %p52 = scmp.eq.s32.totalorder 0, 0
    // Predicated region
    $region18: #{tpu_custom_call.1} parent=1 // pred_check
      %p53 = pneg %p52
    $region19: #{tpu_custom_call.1} parent=1 // pred_check_branch
      %55 = sbr.rel (%p53) target = $region21
    $region20: #{tpu_custom_call.1} parent=1 // pred_region
      %56 = vst [vmem:[#allocation7] sm:$0xff] 0.0
    $region21: #{tpu_custom_call.1} parent=1 // pred_fallthru
      _
    %v57 = vld [vmem:[#allocation5] sm:$0xff]
    %v58 = vld [vmem:[#allocation5 + $0x8] sm:$0xff]
    %v59 = vld [vmem:[#allocation2] sm:$0xff]
    %v60 = vld [vmem:[#allocation2 + $0x8] sm:$0xff]
    %v61 = vsub.f32 %v57, %v59
    %v62 = vsub.f32 %v58, %v60
    %v63 = vmul.f32 %v61, %v61
    %v64 = vmul.f32 %v62, %v62
    %v65 = vld [vmem:[#allocation7] sm:$0xff]
    %v66 = vadd.f32 %v63, %v64
    %v67 = vadd.f32 %v65, %v66
    %68 = vst [vmem:[#allocation7] sm:$0xff] %v67
    // Predicated region
    $region22: #{tpu_custom_call.1} parent=1 // pred_check
      _
    $region23: #{tpu_custom_call.1} parent=1 // pred_check_branch
      %70 = sbr.rel (0) target = $region25
    $region24: #{tpu_custom_call.1} parent=1 // pred_region
      %s72 = ssub.s32 128, 128
      %73 = vsyncadd [#allocation4], %s72
      %s75 = sshll.u32 [#allocation7], 4
      %s76 = int_to_ptr.vmem [resolvable:$true] %s75
      %78 = dma.vmem_to_hbm [thread:$0]  %s76, 128, %s2, [#allocation4]
    $region25: #{tpu_custom_call.1} parent=1 // pred_fallthru
      _
    // Predicated region
    $region26: #{tpu_custom_call.1} parent=1 // pred_check
      _
    $region27: #{tpu_custom_call.1} parent=1 // pred_check_branch
      %80 = sbr.rel (0) target = $region29
    $region28: #{tpu_custom_call.1} parent=1 // pred_region
      %81 = dma.done [#allocation4], 128
    $region29: #{tpu_custom_call.1} parent=1 // pred_fallthru
      _
    %82 = vsyncpa [#allocation3], 1
    %83 = vsyncpa [#allocation6], 1
    %84 = vsyncpa [#allocation4], 1

</llo_original>
